<compile_context>
chip_gen: v7x
topology: tpu7x:2x2x1
jax: 0.10.0
libtpu: 0.0.40
codegen_flags: <defaults>
</compile_context>

<pallas_src>
import functools

import jax
import jax.numpy as jnp
from jax import lax
from jax.experimental import pallas as pl
from jax.experimental.pallas import tpu as pltpu

VOCAB = 361                 # nn.Embedding(361, dim)
VOCAB_PADDED = 384          # 3 * 128 -> lane-aligned K dim for the MXU
LANE = 128                  # lane width; output/feature dim granularity
MXU_M = 256                 # row-tile granularity (256x256 MXU on v6e/v7x, /128 on v5e)


def _round_up(x, m):
    return ((x + m - 1) // m) * m


def _embed_kernel(idx_ref, table_ref, out_ref):
    # idx_ref:   (tm, 1)                 int32   block of flattened indices
    # table_ref: (VOCAB_PADDED, dim_p)   bf16 (default) or f32, VMEM-resident
    # out_ref:   (tm, dim_p)             float32
    idx = idx_ref[...]                                            # (tm, 1)
    tm = idx.shape[0]
    v = table_ref.shape[0]                                        # 384
    iota = lax.broadcasted_iota(jnp.int32, (tm, v), 1)            # (tm, 384)
    onehot = (iota == idx).astype(table_ref.dtype)                # exact 0/1 even in bf16
    # bf16 x bf16 with f32 accumulate: each output element is a single
    # 1.0 * table_value (exact).  For an f32 table force a highest-precision
    # dot so the MXU does not silently round the table rows to bf16.
    prec = (lax.Precision.HIGHEST if table_ref.dtype == jnp.float32
            else lax.Precision.DEFAULT)
    out_ref[...] = jnp.dot(onehot, table_ref[...],
                           precision=prec,
                           preferred_element_type=jnp.float32)


def _choose_tile(total_rows, tm):
    """Row tile: MXU-granular, clamped to the problem, >=2 grid steps when useful."""
    tm = max(MXU_M, _round_up(min(tm, total_rows), MXU_M))
    if total_rows > MXU_M:
        # Aim for at least two grid steps so dimension_semantics=("parallel",)
        # can shard across v7x's two TensorCores for mid-size inputs.
        half = max(MXU_M, _round_up(pl.cdiv(total_rows, 2), MXU_M))
        tm = min(tm, half)
    return tm


def embedding_lookup_flat(flat_idx, table_padded, *, tm=512):
    """flat_idx: (T,) int32, table_padded: (VOCAB_PADDED, dim_p) -> (T, dim_p) f32."""
    T = flat_idx.shape[0]
    V, dim_p = table_padded.shape

    tm = _choose_tile(T, tm)
    Tp = _round_up(T, tm)
    if Tp != T:
        # Padded rows look up index 0; they are sliced off below.
        flat_idx = jnp.pad(flat_idx, (0, Tp - T))
    idx2d = flat_idx.reshape(Tp, 1)

    # Explicit scoped-VMEM budget (matters on v5e whose default is 16 MiB).
    out_bytes = 4
    tbl_bytes = table_padded.dtype.itemsize
    vmem_need = (2 * tm * dim_p * out_bytes          # double-buffered out tiles
                 + 2 * V * dim_p * tbl_bytes         # table pipeline buffers
                 + 2 * tm * 4                        # index tiles
                 + 2 * tm * V * max(tbl_bytes, 4))   # one-hot temporary + slack
    vmem_limit = int(min(max(int(vmem_need * 1.5) + (4 << 20), 32 << 20), 60 << 20))

    out = pl.pallas_call(
        _embed_kernel,
        out_shape=jax.ShapeDtypeStruct((Tp, dim_p), jnp.float32),
        grid_spec=pltpu.PrefetchScalarGridSpec(
            num_scalar_prefetch=0,
            grid=(Tp // tm,),
            in_specs=[
                pl.BlockSpec((tm, 1), lambda i: (i, 0)),     # index block
                pl.BlockSpec((V, dim_p), lambda i: (0, 0)),  # full table, VMEM-resident
            ],
            out_specs=pl.BlockSpec((tm, dim_p), lambda i: (i, 0)),
        ),
        compiler_params=pltpu.CompilerParams(
            dimension_semantics=("parallel",),   # shards grid steps across TCs (v7x)
            vmem_limit_bytes=vmem_limit,
        ),
    )(idx2d, table_padded)

    if Tp != T:
        out = out[:T]
    return out


@functools.partial(jax.jit, static_argnames=("dim", "tm"))
def _path_embed_forward(table_padded, paths, *, dim, tm):
    # One fused lookup over the concatenation of all path indices; the per-path
    # split/reshape happens inside jit so XLA fuses it (no extra HBM pass).
    shapes = [tuple(p.shape) for p in paths]
    flat = jnp.concatenate([p.reshape(-1).astype(jnp.int32) for p in paths], axis=0)
    emb = embedding_lookup_flat(flat, table_padded, tm=tm)       # (T, dim_p) f32
    emb = emb[:, :dim]                                           # drop lane padding (no-op if dim%128==0)
    outs = []
    off = 0
    for (B, S) in shapes:
        n = B * S
        outs.append(emb[off:off + n].reshape(B, S, dim))
        off += n
    return outs


class PathEmbedPallas:
    """Pallas equivalent of PathEmbed."""

    def __init__(self, dim=512, key=None, table_dtype=jnp.bfloat16):
        if key is None:
            key = jax.random.PRNGKey(0)
        self.dim = dim
        # Canonical f32 parameters (nn.Embedding default init is N(0, 1)).
        self.table = jax.random.normal(key, (VOCAB, dim), dtype=jnp.float32)
        # Kernel-side table: vocab padded 361 -> 384 and the feature dim padded
        # to a multiple of 128 (lane-dense output stores).  Rows [361, 384) and
        # the padded columns are zero and never selected / sliced off.
        # TODO(synk): bf16 table rounds the embedding values (~2^-9 rel.); pass
        # table_dtype=jnp.float32 for bit-exact lookups (slower, esp. on v5e).
        self.dim_padded = _round_up(dim, LANE)
        tbl = jnp.pad(self.table, ((0, VOCAB_PADDED - VOCAB),
                                   (0, self.dim_padded - dim)))
        self.table_padded = tbl.astype(table_dtype)

    def __call__(self, paths, *, tm=512):
        # forward: same per-path outputs as the PyTorch module.
        return _path_embed_forward(self.table_padded, list(paths),
                                   dim=self.dim, tm=tm)


if __name__ == "__main__":
    key = jax.random.PRNGKey(0)
    k_tab, k_p1, k_p2, k_p3 = jax.random.split(key, 4)

    dim = 128          # small hidden size (module default is 512)
    B, S = 2, 8        # batch=2, seq=8

    model = PathEmbedPallas(dim=dim, key=k_tab)

    paths = [
        jax.random.randint(k_p1, (B, S), 0, VOCAB, dtype=jnp.int32),
        jax.random.randint(k_p2, (B, S), 0, VOCAB, dtype=jnp.int32),
        jax.random.randint(k_p3, (B, S), 0, VOCAB, dtype=jnp.int32),
    ]

    outs = model(paths)
    outs = [jax.block_until_ready(o) for o in outs]

    # Correctness: exact vs. the (bf16-rounded) kernel table, and close to the
    # canonical f32 parameters (bf16 rounding only, rel err <= 2^-9).
    ref_table_bf16 = model.table_padded[:VOCAB, :dim].astype(jnp.float32)
    ok = True
    for p, o in zip(paths, outs):
        ok = ok and (o.shape == (B, S, dim))
        ref_exact = ref_table_bf16[p].reshape(B, S, dim)
        ok = ok and bool(jnp.allclose(o, ref_exact, atol=1e-6, rtol=1e-6))
        ref_f32 = model.table[p].reshape(B, S, dim)
        ok = ok and bool(jnp.allclose(o, ref_f32, atol=1e-2, rtol=1e-2))

    if ok:
        print("KERNEL_OK")
    else:
        raise SystemExit("mismatch vs reference")
</pallas_src>

<mosaic_0001>
module attributes {stable_mosaic.version = 11 : i64} {
  func.func @_embed_kernel(%arg0: i32, %arg1: memref<256x1xi32, #tpu.memory_space<vmem>>, %arg2: memref<384x128xbf16, #tpu.memory_space<vmem>>, %arg3: memref<256x128xf32, #tpu.memory_space<vmem>>) attributes {dimension_semantics = [#tpu.dimension_semantics<parallel>], iteration_bounds = array<i64: 1>, scalar_prefetch = 0 : i64, scratch_operands = 0 : i64, tpu.core_type = #tpu.core_type<tc>, window_params = [{transform_indices = @transform_0, window_bounds = array<i64: 256, 1>}, {pipeline_mode = #tpu.pipeline_mode<synchronous>, transform_indices = @transform_1, window_bounds = array<i64: 384, 128>}, {transform_indices = @transform_2, window_bounds = array<i64: 256, 128>}]} {
    %c0 = arith.constant 0 : index
    %c0_0 = arith.constant 0 : index
    %0 = vector.load %arg1[%c0, %c0_0] : memref<256x1xi32, #tpu.memory_space<vmem>>, vector<256x1xi32>
    %1 = tpu.iota {dimensions = array<i32: 1>} : vector<256x384xi32>
    %2 = vector.broadcast %0 : vector<256x1xi32> to vector<256x384xi32>
    %3 = arith.cmpi eq, %1, %2 : vector<256x384xi32>
    %4 = arith.extui %3 : vector<256x384xi1> to vector<256x384xi32>
    %5 = arith.sitofp %4 : vector<256x384xi32> to vector<256x384xf32>
    %6 = arith.truncf %5 : vector<256x384xf32> to vector<256x384xbf16>
    %c0_1 = arith.constant 0 : index
    %c0_2 = arith.constant 0 : index
    %7 = vector.load %arg2[%c0_1, %c0_2] : memref<384x128xbf16, #tpu.memory_space<vmem>>, vector<384x128xbf16>
    %cst = arith.constant dense<0.000000e+00> : vector<256x128xf32>
    %8 = tpu.matmul %6, %7, %cst {dimension_numbers = #tpu.dot_dimension_numbers<[1], [0], [0], [1], [0, 0, 1, 1], [], []>} : vector<256x384xbf16>, vector<384x128xbf16>, vector<256x128xf32> -> vector<256x128xf32>
    %c0_3 = arith.constant 0 : index
    %c0_4 = arith.constant 0 : index
    %9 = vector.load %arg3[%c0_3, %c0_4] : memref<256x128xf32, #tpu.memory_space<vmem>>, vector<256x128xf32>
    tpu.vector_store %arg3[%c0_3, %c0_4], %8 {strides = array<i32>} : memref<256x128xf32, #tpu.memory_space<vmem>>, vector<256x128xf32>,
    return
  }
  func.func @transform_0(%arg0: i32) -> (i32, i32) {
    %c0_i32 = arith.constant 0 : i32
    %c0_i32_0 = arith.constant 0 : i32
    return %arg0, %c0_i32 : i32, i32
  }
  func.func @transform_1(%arg0: i32) -> (i32, i32) {
    %c0_i32 = arith.constant 0 : i32
    %c0_i32_0 = arith.constant 0 : i32
    %c0_i32_1 = arith.constant 0 : i32
    return %c0_i32, %c0_i32_0 : i32, i32
  }
  func.func @transform_2(%arg0: i32) -> (i32, i32) {
    %c0_i32 = arith.constant 0 : i32
    %c0_i32_0 = arith.constant 0 : i32
    return %arg0, %c0_i32 : i32, i32
  }
}

</mosaic_0001>

<llo_original>
// kernel: _path_embed_forward.1
$region0: #{_path_embed_forward.1}
  #allocation0 [shape = 'u32[]', space=smem, size = 0x4, offset = 0x4, fixed_abs, tag = 'smem constant byte address 0x4 - core index']
  #allocation1 [shape = 'u32[144,128]{1,0:T(1,128)}', space=vmem, size = 0x12000, scoped, tag = 'internal scratch']
  %s0 = inlined_call_operand.vmem [shape: s32[256,1], index: 0, kind: input, shape index: {}]
  %s1 = inlined_call_operand.vmem [shape: bf16[384,128], index: 1, kind: input, shape index: {}]
  %s2 = inlined_call_operand.vmem [shape: f32[256,128], index: 2, kind: output, shape index: {}]
  %s3 = sld [smem:[#allocation0]]
  $region18: #{_path_embed_forward.1} parent=0
    _
  %s5 = ssub.s32 1, %s3
  %s6 = scalar_select 0, %s5, %s3
  // Predicated region
  $region2: #{_path_embed_forward.1} parent=0 // pred_check
    _
  $region3: #{_path_embed_forward.1} parent=0 // pred_check_branch
    %8 = sbr.rel (0) target = $region5
  $region4: #{_path_embed_forward.1} parent=0 // pred_region
    _
  $region5: #{_path_embed_forward.1} parent=0 // pred_fallthru
    _
  // Predicated region
  $region6: #{_path_embed_forward.1} parent=0 // pred_check
    _
  $region7: #{_path_embed_forward.1} parent=0 // pred_check_branch
    %10 = sbr.rel (0) target = $region9
  $region8: #{_path_embed_forward.1} parent=0 // pred_region
    _
  $region9: #{_path_embed_forward.1} parent=0 // pred_fallthru
    _
  %v12 = vld [vmem:[%s0] sm:$0xff]
  %v13 = vld [vmem:[%s0 + $0x8] sm:$0xff]
  %v14 = vld [vmem:[%s0 + $0x10] sm:$0xff]
  %v15 = vld [vmem:[%s0 + $0x18] sm:$0xff]
  %v16 = vld [vmem:[%s0 + $0x20] sm:$0xff]
  %v17 = vld [vmem:[%s0 + $0x28] sm:$0xff]
  %v18 = vld [vmem:[%s0 + $0x30] sm:$0xff]
  %v19 = vld [vmem:[%s0 + $0x38] sm:$0xff]
  %v20 = vld [vmem:[%s0 + $0x40] sm:$0xff]
  %v21 = vld [vmem:[%s0 + $0x48] sm:$0xff]
  %v22 = vld [vmem:[%s0 + $0x50] sm:$0xff]
  %v23 = vld [vmem:[%s0 + $0x58] sm:$0xff]
  %v24 = vld [vmem:[%s0 + $0x60] sm:$0xff]
  %v25 = vld [vmem:[%s0 + $0x68] sm:$0xff]
  %v26 = vld [vmem:[%s0 + $0x70] sm:$0xff]
  %v27 = vld [vmem:[%s0 + $0x78] sm:$0xff]
  %v28 = vld [vmem:[%s0 + $0x80] sm:$0xff]
  %v29 = vld [vmem:[%s0 + $0x88] sm:$0xff]
  %v30 = vld [vmem:[%s0 + $0x90] sm:$0xff]
  %v31 = vld [vmem:[%s0 + $0x98] sm:$0xff]
  %v32 = vld [vmem:[%s0 + $0xa0] sm:$0xff]
  %v33 = vld [vmem:[%s0 + $0xa8] sm:$0xff]
  %v34 = vld [vmem:[%s0 + $0xb0] sm:$0xff]
  %v35 = vld [vmem:[%s0 + $0xb8] sm:$0xff]
  %v36 = vld [vmem:[%s0 + $0xc0] sm:$0xff]
  %v37 = vld [vmem:[%s0 + $0xc8] sm:$0xff]
  %v38 = vld [vmem:[%s0 + $0xd0] sm:$0xff]
  %v39 = vld [vmem:[%s0 + $0xd8] sm:$0xff]
  %v40 = vld [vmem:[%s0 + $0xe0] sm:$0xff]
  %v41 = vld [vmem:[%s0 + $0xe8] sm:$0xff]
  %v42 = vld [vmem:[%s0 + $0xf0] sm:$0xff]
  %v43 = vld [vmem:[%s0 + $0xf8] sm:$0xff]
  %v44 = vlaneseq
  %v45 = vand.u32 %v44, 127
  %v46 = vadd.s32 %v45, 128
  %v47 = vadd.s32 %v45, 256
  %48 = vset.pattern.permute.xlu0 0
  %49 = vperm.xlu0 %48, %v12
  %v50 = vpop.permute.xlu0 %49
  %51 = vset.pattern.permute.xlu0 0
  %52 = vperm.xlu0 %51, %v13
  %v53 = vpop.permute.xlu0 %52
  %54 = vset.pattern.permute.xlu0 0
  %55 = vperm.xlu0 %54, %v14
  %v56 = vpop.permute.xlu0 %55
  %57 = vset.pattern.permute.xlu0 0
  %58 = vperm.xlu0 %57, %v15
  %v59 = vpop.permute.xlu0 %58
  %60 = vset.pattern.permute.xlu0 0
  %61 = vperm.xlu0 %60, %v16
  %v62 = vpop.permute.xlu0 %61
  %63 = vset.pattern.permute.xlu0 0
  %64 = vperm.xlu0 %63, %v17
  %v65 = vpop.permute.xlu0 %64
  %66 = vset.pattern.permute.xlu0 0
  %67 = vperm.xlu0 %66, %v18
  %v68 = vpop.permute.xlu0 %67
  %69 = vset.pattern.permute.xlu0 0
  %70 = vperm.xlu0 %69, %v19
  %v71 = vpop.permute.xlu0 %70
  %72 = vset.pattern.permute.xlu0 0
  %73 = vperm.xlu0 %72, %v20
  %v74 = vpop.permute.xlu0 %73
  %75 = vset.pattern.permute.xlu0 0
  %76 = vperm.xlu0 %75, %v21
  %v77 = vpop.permute.xlu0 %76
  %78 = vset.pattern.permute.xlu0 0
  %79 = vperm.xlu0 %78, %v22
  %v80 = vpop.permute.xlu0 %79
  %81 = vset.pattern.permute.xlu0 0
  %82 = vperm.xlu0 %81, %v23
  %v83 = vpop.permute.xlu0 %82
  %84 = vset.pattern.permute.xlu0 0
  %85 = vperm.xlu0 %84, %v24
  %v86 = vpop.permute.xlu0 %85
  %87 = vset.pattern.permute.xlu0 0
  %88 = vperm.xlu0 %87, %v25
  %v89 = vpop.permute.xlu0 %88
  %90 = vset.pattern.permute.xlu0 0
  %91 = vperm.xlu0 %90, %v26
  %v92 = vpop.permute.xlu0 %91
  %93 = vset.pattern.permute.xlu0 0
  %94 = vperm.xlu0 %93, %v27
  %v95 = vpop.permute.xlu0 %94
  %96 = vset.pattern.permute.xlu0 0
  %97 = vperm.xlu0 %96, %v28
  %v98 = vpop.permute.xlu0 %97
  %99 = vset.pattern.permute.xlu0 0
  %100 = vperm.xlu0 %99, %v29
  %v101 = vpop.permute.xlu0 %100
  %102 = vset.pattern.permute.xlu0 0
  %103 = vperm.xlu0 %102, %v30
  %v104 = vpop.permute.xlu0 %103
  %105 = vset.pattern.permute.xlu0 0
  %106 = vperm.xlu0 %105, %v31
  %v107 = vpop.permute.xlu0 %106
  %108 = vset.pattern.permute.xlu0 0
  %109 = vperm.xlu0 %108, %v32
  %v110 = vpop.permute.xlu0 %109
  %111 = vset.pattern.permute.xlu0 0
  %112 = vperm.xlu0 %111, %v33
  %v113 = vpop.permute.xlu0 %112
  %114 = vset.pattern.permute.xlu0 0
  %115 = vperm.xlu0 %114, %v34
  %v116 = vpop.permute.xlu0 %115
  %117 = vset.pattern.permute.xlu0 0
  %118 = vperm.xlu0 %117, %v35
  %v119 = vpop.permute.xlu0 %118
  %120 = vset.pattern.permute.xlu0 0
  %121 = vperm.xlu0 %120, %v36
  %v122 = vpop.permute.xlu0 %121
  %123 = vset.pattern.permute.xlu0 0
  %124 = vperm.xlu0 %123, %v37
  %v125 = vpop.permute.xlu0 %124
  %126 = vset.pattern.permute.xlu0 0
  %127 = vperm.xlu0 %126, %v38
  %v128 = vpop.permute.xlu0 %127
  %129 = vset.pattern.permute.xlu0 0
  %130 = vperm.xlu0 %129, %v39
  %v131 = vpop.permute.xlu0 %130
  %132 = vset.pattern.permute.xlu0 0
  %133 = vperm.xlu0 %132, %v40
  %v134 = vpop.permute.xlu0 %133
  %135 = vset.pattern.permute.xlu0 0
  %136 = vperm.xlu0 %135, %v41
  %v137 = vpop.permute.xlu0 %136
  %138 = vset.pattern.permute.xlu0 0
  %139 = vperm.xlu0 %138, %v42
  %v140 = vpop.permute.xlu0 %139
  %141 = vset.pattern.permute.xlu0 0
  %142 = vperm.xlu0 %141, %v43
  %v143 = vpop.permute.xlu0 %142
  %vm144 = vcmp.eq.s32.totalorder %v45, %v50
  %vm145 = vcmp.eq.s32.totalorder %v46, %v50
  %vm146 = vcmp.eq.s32.totalorder %v47, %v50
  %vm147 = vcmp.eq.s32.totalorder %v45, %v53
  %vm148 = vcmp.eq.s32.totalorder %v46, %v53
  %vm149 = vcmp.eq.s32.totalorder %v47, %v53
  %vm150 = vcmp.eq.s32.totalorder %v45, %v56
  %vm151 = vcmp.eq.s32.totalorder %v46, %v56
  %vm152 = vcmp.eq.s32.totalorder %v47, %v56
  %vm153 = vcmp.eq.s32.totalorder %v45, %v59
  %vm154 = vcmp.eq.s32.totalorder %v46, %v59
  %vm155 = vcmp.eq.s32.totalorder %v47, %v59
  %vm156 = vcmp.eq.s32.totalorder %v45, %v62
  %vm157 = vcmp.eq.s32.totalorder %v46, %v62
  %vm158 = vcmp.eq.s32.totalorder %v47, %v62
  %vm159 = vcmp.eq.s32.totalorder %v45, %v65
  %vm160 = vcmp.eq.s32.totalorder %v46, %v65
  %vm161 = vcmp.eq.s32.totalorder %v47, %v65
  %vm162 = vcmp.eq.s32.totalorder %v45, %v68
  %vm163 = vcmp.eq.s32.totalorder %v46, %v68
  %vm164 = vcmp.eq.s32.totalorder %v47, %v68
  %vm165 = vcmp.eq.s32.totalorder %v45, %v71
  %vm166 = vcmp.eq.s32.totalorder %v46, %v71
  %vm167 = vcmp.eq.s32.totalorder %v47, %v71
  %vm168 = vcmp.eq.s32.totalorder %v45, %v74
  %vm169 = vcmp.eq.s32.totalorder %v46, %v74
  %vm170 = vcmp.eq.s32.totalorder %v47, %v74
  %vm171 = vcmp.eq.s32.totalorder %v45, %v77
  %vm172 = vcmp.eq.s32.totalorder %v46, %v77
  %vm173 = vcmp.eq.s32.totalorder %v47, %v77
  %vm174 = vcmp.eq.s32.totalorder %v45, %v80
  %vm175 = vcmp.eq.s32.totalorder %v46, %v80
  %vm176 = vcmp.eq.s32.totalorder %v47, %v80
  %vm177 = vcmp.eq.s32.totalorder %v45, %v83
  %vm178 = vcmp.eq.s32.totalorder %v46, %v83
  %vm179 = vcmp.eq.s32.totalorder %v47, %v83
  %vm180 = vcmp.eq.s32.totalorder %v45, %v86
  %vm181 = vcmp.eq.s32.totalorder %v46, %v86
  %vm182 = vcmp.eq.s32.totalorder %v47, %v86
  %vm183 = vcmp.eq.s32.totalorder %v45, %v89
  %vm184 = vcmp.eq.s32.totalorder %v46, %v89
  %vm185 = vcmp.eq.s32.totalorder %v47, %v89
  %vm186 = vcmp.eq.s32.totalorder %v45, %v92
  %vm187 = vcmp.eq.s32.totalorder %v46, %v92
  %vm188 = vcmp.eq.s32.totalorder %v47, %v92
  %vm189 = vcmp.eq.s32.totalorder %v45, %v95
  %vm190 = vcmp.eq.s32.totalorder %v46, %v95
  %vm191 = vcmp.eq.s32.totalorder %v47, %v95
  %vm192 = vcmp.eq.s32.totalorder %v45, %v98
  %vm193 = vcmp.eq.s32.totalorder %v46, %v98
  %vm194 = vcmp.eq.s32.totalorder %v47, %v98
  %vm195 = vcmp.eq.s32.totalorder %v45, %v101
  %vm196 = vcmp.eq.s32.totalorder %v46, %v101
  %vm197 = vcmp.eq.s32.totalorder %v47, %v101
  %vm198 = vcmp.eq.s32.totalorder %v45, %v104
  %vm199 = vcmp.eq.s32.totalorder %v46, %v104
  %vm200 = vcmp.eq.s32.totalorder %v47, %v104
  %vm201 = vcmp.eq.s32.totalorder %v45, %v107
  %vm202 = vcmp.eq.s32.totalorder %v46, %v107
  %vm203 = vcmp.eq.s32.totalorder %v47, %v107
  %vm204 = vcmp.eq.s32.totalorder %v45, %v110
  %vm205 = vcmp.eq.s32.totalorder %v46, %v110
  %vm206 = vcmp.eq.s32.totalorder %v47, %v110
  %vm207 = vcmp.eq.s32.totalorder %v45, %v113
  %vm208 = vcmp.eq.s32.totalorder %v46, %v113
  %vm209 = vcmp.eq.s32.totalorder %v47, %v113
  %vm210 = vcmp.eq.s32.totalorder %v45, %v116
  %vm211 = vcmp.eq.s32.totalorder %v46, %v116
  %vm212 = vcmp.eq.s32.totalorder %v47, %v116
  %vm213 = vcmp.eq.s32.totalorder %v45, %v119
  %vm214 = vcmp.eq.s32.totalorder %v46, %v119
  %vm215 = vcmp.eq.s32.totalorder %v47, %v119
  %vm216 = vcmp.eq.s32.totalorder %v45, %v122
  %vm217 = vcmp.eq.s32.totalorder %v46, %v122
  %vm218 = vcmp.eq.s32.totalorder %v47, %v122
  %vm219 = vcmp.eq.s32.totalorder %v45, %v125
  %vm220 = vcmp.eq.s32.totalorder %v46, %v125
  %vm221 = vcmp.eq.s32.totalorder %v47, %v125
  %vm222 = vcmp.eq.s32.totalorder %v45, %v128
  %vm223 = vcmp.eq.s32.totalorder %v46, %v128
  %vm224 = vcmp.eq.s32.totalorder %v47, %v128
  %vm225 = vcmp.eq.s32.totalorder %v45, %v131
  %vm226 = vcmp.eq.s32.totalorder %v46, %v131
  %vm227 = vcmp.eq.s32.totalorder %v47, %v131
  %vm228 = vcmp.eq.s32.totalorder %v45, %v134
  %vm229 = vcmp.eq.s32.totalorder %v46, %v134
  %vm230 = vcmp.eq.s32.totalorder %v47, %v134
  %vm231 = vcmp.eq.s32.totalorder %v45, %v137
  %vm232 = vcmp.eq.s32.totalorder %v46, %v137
  %vm233 = vcmp.eq.s32.totalorder %v47, %v137
  %vm234 = vcmp.eq.s32.totalorder %v45, %v140
  %vm235 = vcmp.eq.s32.totalorder %v46, %v140
  %vm236 = vcmp.eq.s32.totalorder %v47, %v140
  %vm237 = vcmp.eq.s32.totalorder %v45, %v143
  %vm238 = vcmp.eq.s32.totalorder %v46, %v143
  %vm239 = vcmp.eq.s32.totalorder %v47, %v143
  %v240 = vsel %vm144, 1, 0
  %v241 = vsel %vm145, 1, 0
  %v242 = vsel %vm146, 1, 0
  %v243 = vsel %vm147, 1, 0
  %v244 = vsel %vm148, 1, 0
  %v245 = vsel %vm149, 1, 0
  %v246 = vsel %vm150, 1, 0
  %v247 = vsel %vm151, 1, 0
  %v248 = vsel %vm152, 1, 0
  %v249 = vsel %vm153, 1, 0
  %v250 = vsel %vm154, 1, 0
  %v251 = vsel %vm155, 1, 0
  %v252 = vsel %vm156, 1, 0
  %v253 = vsel %vm157, 1, 0
  %v254 = vsel %vm158, 1, 0
  %v255 = vsel %vm159, 1, 0
  %v256 = vsel %vm160, 1, 0
  %v257 = vsel %vm161, 1, 0
  %v258 = vsel %vm162, 1, 0
  %v259 = vsel %vm163, 1, 0
  %v260 = vsel %vm164, 1, 0
  %v261 = vsel %vm165, 1, 0
  %v262 = vsel %vm166, 1, 0
  %v263 = vsel %vm167, 1, 0
  %v264 = vsel %vm168, 1, 0
  %v265 = vsel %vm169, 1, 0
  %v266 = vsel %vm170, 1, 0
  %v267 = vsel %vm171, 1, 0
  %v268 = vsel %vm172, 1, 0
  %v269 = vsel %vm173, 1, 0
  %v270 = vsel %vm174, 1, 0
  %v271 = vsel %vm175, 1, 0
  %v272 = vsel %vm176, 1, 0
  %v273 = vsel %vm177, 1, 0
  %v274 = vsel %vm178, 1, 0
  %v275 = vsel %vm179, 1, 0
  %v276 = vsel %vm180, 1, 0
  %v277 = vsel %vm181, 1, 0
  %v278 = vsel %vm182, 1, 0
  %v279 = vsel %vm183, 1, 0
  %v280 = vsel %vm184, 1, 0
  %v281 = vsel %vm185, 1, 0
  %v282 = vsel %vm186, 1, 0
  %v283 = vsel %vm187, 1, 0
  %v284 = vsel %vm188, 1, 0
  %v285 = vsel %vm189, 1, 0
  %v286 = vsel %vm190, 1, 0
  %v287 = vsel %vm191, 1, 0
  %v288 = vsel %vm192, 1, 0
  %v289 = vsel %vm193, 1, 0
  %v290 = vsel %vm194, 1, 0
  %v291 = vsel %vm195, 1, 0
  %v292 = vsel %vm196, 1, 0
  %v293 = vsel %vm197, 1, 0
  %v294 = vsel %vm198, 1, 0
  %v295 = vsel %vm199, 1, 0
  %v296 = vsel %vm200, 1, 0
  %v297 = vsel %vm201, 1, 0
  %v298 = vsel %vm202, 1, 0
  %v299 = vsel %vm203, 1, 0
  %v300 = vsel %vm204, 1, 0
  %v301 = vsel %vm205, 1, 0
  %v302 = vsel %vm206, 1, 0
  %v303 = vsel %vm207, 1, 0
  %v304 = vsel %vm208, 1, 0
  %v305 = vsel %vm209, 1, 0
  %v306 = vsel %vm210, 1, 0
  %v307 = vsel %vm211, 1, 0
  %v308 = vsel %vm212, 1, 0
  %v309 = vsel %vm213, 1, 0
  %v310 = vsel %vm214, 1, 0
  %v311 = vsel %vm215, 1, 0
  %v312 = vsel %vm216, 1, 0
  %v313 = vsel %vm217, 1, 0
  %v314 = vsel %vm218, 1, 0
  %v315 = vsel %vm219, 1, 0
  %v316 = vsel %vm220, 1, 0
  %v317 = vsel %vm221, 1, 0
  %v318 = vsel %vm222, 1, 0
  %v319 = vsel %vm223, 1, 0
  %v320 = vsel %vm224, 1, 0
  %v321 = vsel %vm225, 1, 0
  %v322 = vsel %vm226, 1, 0
  %v323 = vsel %vm227, 1, 0
  %v324 = vsel %vm228, 1, 0
  %v325 = vsel %vm229, 1, 0
  %v326 = vsel %vm230, 1, 0
  %v327 = vsel %vm231, 1, 0
  %v328 = vsel %vm232, 1, 0
  %v329 = vsel %vm233, 1, 0
  %v330 = vsel %vm234, 1, 0
  %v331 = vsel %vm235, 1, 0
  %v332 = vsel %vm236, 1, 0
  %v333 = vsel %vm237, 1, 0
  %v334 = vsel %vm238, 1, 0
  %v335 = vsel %vm239, 1, 0
  %v336 = vcvt.s32.f32 %v240
  %v337 = vcvt.s32.f32 %v241
  %v338 = vcvt.s32.f32 %v242
  %v339 = vcvt.s32.f32 %v243
  %v340 = vcvt.s32.f32 %v244
  %v341 = vcvt.s32.f32 %v245
  %v342 = vcvt.s32.f32 %v246
  %v343 = vcvt.s32.f32 %v247
  %v344 = vcvt.s32.f32 %v248
  %v345 = vcvt.s32.f32 %v249
  %v346 = vcvt.s32.f32 %v250
  %v347 = vcvt.s32.f32 %v251
  %v348 = vcvt.s32.f32 %v252
  %v349 = vcvt.s32.f32 %v253
  %v350 = vcvt.s32.f32 %v254
  %v351 = vcvt.s32.f32 %v255
  %v352 = vcvt.s32.f32 %v256
  %v353 = vcvt.s32.f32 %v257
  %v354 = vcvt.s32.f32 %v258
  %v355 = vcvt.s32.f32 %v259
  %v356 = vcvt.s32.f32 %v260
  %v357 = vcvt.s32.f32 %v261
  %v358 = vcvt.s32.f32 %v262
  %v359 = vcvt.s32.f32 %v263
  %v360 = vcvt.s32.f32 %v264
  %v361 = vcvt.s32.f32 %v265
  %v362 = vcvt.s32.f32 %v266
  %v363 = vcvt.s32.f32 %v267
  %v364 = vcvt.s32.f32 %v268
  %v365 = vcvt.s32.f32 %v269
  %v366 = vcvt.s32.f32 %v270
  %v367 = vcvt.s32.f32 %v271
  %v368 = vcvt.s32.f32 %v272
  %v369 = vcvt.s32.f32 %v273
  %v370 = vcvt.s32.f32 %v274
  %v371 = vcvt.s32.f32 %v275
  %v372 = vcvt.s32.f32 %v276
  %v373 = vcvt.s32.f32 %v277
  %v374 = vcvt.s32.f32 %v278
  %v375 = vcvt.s32.f32 %v279
  %v376 = vcvt.s32.f32 %v280
  %v377 = vcvt.s32.f32 %v281
  %v378 = vcvt.s32.f32 %v282
  %v379 = vcvt.s32.f32 %v283
  %v380 = vcvt.s32.f32 %v284
  %v381 = vcvt.s32.f32 %v285
  %v382 = vcvt.s32.f32 %v286
  %v383 = vcvt.s32.f32 %v287
  %v384 = vcvt.s32.f32 %v288
  %v385 = vcvt.s32.f32 %v289
  %v386 = vcvt.s32.f32 %v290
  %v387 = vcvt.s32.f32 %v291
  %v388 = vcvt.s32.f32 %v292
  %v389 = vcvt.s32.f32 %v293
  %v390 = vcvt.s32.f32 %v294
  %v391 = vcvt.s32.f32 %v295
  %v392 = vcvt.s32.f32 %v296
  %v393 = vcvt.s32.f32 %v297
  %v394 = vcvt.s32.f32 %v298
  %v395 = vcvt.s32.f32 %v299
  %v396 = vcvt.s32.f32 %v300
  %v397 = vcvt.s32.f32 %v301
  %v398 = vcvt.s32.f32 %v302
  %v399 = vcvt.s32.f32 %v303
  %v400 = vcvt.s32.f32 %v304
  %v401 = vcvt.s32.f32 %v305
  %v402 = vcvt.s32.f32 %v306
  %v403 = vcvt.s32.f32 %v307
  %v404 = vcvt.s32.f32 %v308
  %v405 = vcvt.s32.f32 %v309
  %v406 = vcvt.s32.f32 %v310
  %v407 = vcvt.s32.f32 %v311
  %v408 = vcvt.s32.f32 %v312
  %v409 = vcvt.s32.f32 %v313
  %v410 = vcvt.s32.f32 %v314
  %v411 = vcvt.s32.f32 %v315
  %v412 = vcvt.s32.f32 %v316
  %v413 = vcvt.s32.f32 %v317
  %v414 = vcvt.s32.f32 %v318
  %v415 = vcvt.s32.f32 %v319
  %v416 = vcvt.s32.f32 %v320
  %v417 = vcvt.s32.f32 %v321
  %v418 = vcvt.s32.f32 %v322
  %v419 = vcvt.s32.f32 %v323
  %v420 = vcvt.s32.f32 %v324
  %v421 = vcvt.s32.f32 %v325
  %v422 = vcvt.s32.f32 %v326
  %v423 = vcvt.s32.f32 %v327
  %v424 = vcvt.s32.f32 %v328
  %v425 = vcvt.s32.f32 %v329
  %v426 = vcvt.s32.f32 %v330
  %v427 = vcvt.s32.f32 %v331
  %v428 = vcvt.s32.f32 %v332
  %v429 = vcvt.s32.f32 %v333
  %v430 = vcvt.s32.f32 %v334
  %v431 = vcvt.s32.f32 %v335
  %v432 = vpack.c.bf16 %v339, %v336
  %v433 = vpack.c.bf16 %v340, %v337
  %v434 = vpack.c.bf16 %v341, %v338
  %v435 = vpack.c.bf16 %v345, %v342
  %v436 = vpack.c.bf16 %v346, %v343
  %v437 = vpack.c.bf16 %v347, %v344
  %v438 = vpack.c.bf16 %v351, %v348
  %v439 = vpack.c.bf16 %v352, %v349
  %v440 = vpack.c.bf16 %v353, %v350
  %v441 = vpack.c.bf16 %v357, %v354
  %v442 = vpack.c.bf16 %v358, %v355
  %v443 = vpack.c.bf16 %v359, %v356
  %v444 = vpack.c.bf16 %v363, %v360
  %v445 = vpack.c.bf16 %v364, %v361
  %v446 = vpack.c.bf16 %v365, %v362
  %v447 = vpack.c.bf16 %v369, %v366
  %v448 = vpack.c.bf16 %v370, %v367
  %v449 = vpack.c.bf16 %v371, %v368
  %v450 = vpack.c.bf16 %v375, %v372
  %v451 = vpack.c.bf16 %v376, %v373
  %v452 = vpack.c.bf16 %v377, %v374
  %v453 = vpack.c.bf16 %v381, %v378
  %v454 = vpack.c.bf16 %v382, %v379
  %v455 = vpack.c.bf16 %v383, %v380
  %v456 = vpack.c.bf16 %v387, %v384
  %v457 = vpack.c.bf16 %v388, %v385
  %v458 = vpack.c.bf16 %v389, %v386
  %v459 = vpack.c.bf16 %v393, %v390
  %v460 = vpack.c.bf16 %v394, %v391
  %v461 = vpack.c.bf16 %v395, %v392
  %v462 = vpack.c.bf16 %v399, %v396
  %v463 = vpack.c.bf16 %v400, %v397
  %v464 = vpack.c.bf16 %v401, %v398
  %v465 = vpack.c.bf16 %v405, %v402
  %v466 = vpack.c.bf16 %v406, %v403
  %v467 = vpack.c.bf16 %v407, %v404
  %v468 = vpack.c.bf16 %v411, %v408
  %v469 = vpack.c.bf16 %v412, %v409
  %v470 = vpack.c.bf16 %v413, %v410
  %v471 = vpack.c.bf16 %v417, %v414
  %v472 = vpack.c.bf16 %v418, %v415
  %v473 = vpack.c.bf16 %v419, %v416
  %v474 = vpack.c.bf16 %v423, %v420
  %v475 = vpack.c.bf16 %v424, %v421
  %v476 = vpack.c.bf16 %v425, %v422
  %v477 = vpack.c.bf16 %v429, %v426
  %v478 = vpack.c.bf16 %v430, %v427
  %v479 = vpack.c.bf16 %v431, %v428
  %v480 = vld [vmem:[%s1] sm:$0xf]
  %v481 = vld [vmem:[%s1 + $0x4] sm:$0xf]
  %v482 = vld [vmem:[%s1 + $0x8] sm:$0xf]
  %v483 = vld [vmem:[%s1 + $0xc] sm:$0xf]
  %v484 = vld [vmem:[%s1 + $0x10] sm:$0xf]
  %v485 = vld [vmem:[%s1 + $0x14] sm:$0xf]
  %v486 = vld [vmem:[%s1 + $0x18] sm:$0xf]
  %v487 = vld [vmem:[%s1 + $0x1c] sm:$0xf]
  %v488 = vld [vmem:[%s1 + $0x20] sm:$0xf]
  %v489 = vld [vmem:[%s1 + $0x24] sm:$0xf]
  %v490 = vld [vmem:[%s1 + $0x28] sm:$0xf]
  %v491 = vld [vmem:[%s1 + $0x2c] sm:$0xf]
  %v492 = vld [vmem:[%s1 + $0x30] sm:$0xf]
  %v493 = vld [vmem:[%s1 + $0x34] sm:$0xf]
  %v494 = vld [vmem:[%s1 + $0x38] sm:$0xf]
  %v495 = vld [vmem:[%s1 + $0x3c] sm:$0xf]
  %v496 = vld [vmem:[%s1 + $0x40] sm:$0xf]
  %v497 = vld [vmem:[%s1 + $0x44] sm:$0xf]
  %v498 = vld [vmem:[%s1 + $0x48] sm:$0xf]
  %v499 = vld [vmem:[%s1 + $0x4c] sm:$0xf]
  %v500 = vld [vmem:[%s1 + $0x50] sm:$0xf]
  %v501 = vld [vmem:[%s1 + $0x54] sm:$0xf]
  %v502 = vld [vmem:[%s1 + $0x58] sm:$0xf]
  %v503 = vld [vmem:[%s1 + $0x5c] sm:$0xf]
  %v504 = vld [vmem:[%s1 + $0x60] sm:$0xf]
  %v505 = vld [vmem:[%s1 + $0x64] sm:$0xf]
  %v506 = vld [vmem:[%s1 + $0x68] sm:$0xf]
  %v507 = vld [vmem:[%s1 + $0x6c] sm:$0xf]
  %v508 = vld [vmem:[%s1 + $0x70] sm:$0xf]
  %v509 = vld [vmem:[%s1 + $0x74] sm:$0xf]
  %v510 = vld [vmem:[%s1 + $0x78] sm:$0xf]
  %v511 = vld [vmem:[%s1 + $0x7c] sm:$0xf]
  %v512 = vld [vmem:[%s1 + $0x80] sm:$0xf]
  %v513 = vld [vmem:[%s1 + $0x84] sm:$0xf]
  %v514 = vld [vmem:[%s1 + $0x88] sm:$0xf]
  %v515 = vld [vmem:[%s1 + $0x8c] sm:$0xf]
  %v516 = vld [vmem:[%s1 + $0x90] sm:$0xf]
  %v517 = vld [vmem:[%s1 + $0x94] sm:$0xf]
  %v518 = vld [vmem:[%s1 + $0x98] sm:$0xf]
  %v519 = vld [vmem:[%s1 + $0x9c] sm:$0xf]
  %v520 = vld [vmem:[%s1 + $0xa0] sm:$0xf]
  %v521 = vld [vmem:[%s1 + $0xa4] sm:$0xf]
  %v522 = vld [vmem:[%s1 + $0xa8] sm:$0xf]
  %v523 = vld [vmem:[%s1 + $0xac] sm:$0xf]
  %v524 = vld [vmem:[%s1 + $0xb0] sm:$0xf]
  %v525 = vld [vmem:[%s1 + $0xb4] sm:$0xf]
  %v526 = vld [vmem:[%s1 + $0xb8] sm:$0xf]
  %v527 = vld [vmem:[%s1 + $0xbc] sm:$0xf]
  %v576 = vunpack.c.l.b16 %v480
  %v577 = vunpack.c.l.b16 %v481
  %v578 = vunpack.c.l.b16 %v482
  %v579 = vunpack.c.l.b16 %v483
  %v580 = vunpack.c.l.b16 %v484
  %v581 = vunpack.c.l.b16 %v485
  %v582 = vunpack.c.l.b16 %v486
  %v583 = vunpack.c.l.b16 %v487
  %v584 = vunpack.c.l.b16 %v488
  %v585 = vunpack.c.l.b16 %v489
  %v586 = vunpack.c.l.b16 %v490
  %v587 = vunpack.c.l.b16 %v491
  %v588 = vunpack.c.l.b16 %v492
  %v589 = vunpack.c.l.b16 %v493
  %v590 = vunpack.c.l.b16 %v494
  %v591 = vunpack.c.l.b16 %v495
  %v592 = vunpack.c.l.b16 %v496
  %v593 = vunpack.c.l.b16 %v497
  %v594 = vunpack.c.l.b16 %v498
  %v595 = vunpack.c.l.b16 %v499
  %v596 = vunpack.c.l.b16 %v500
  %v597 = vunpack.c.l.b16 %v501
  %v598 = vunpack.c.l.b16 %v502
  %v599 = vunpack.c.l.b16 %v503
  %v600 = vunpack.c.l.b16 %v504
  %v601 = vunpack.c.l.b16 %v505
  %v602 = vunpack.c.l.b16 %v506
  %v603 = vunpack.c.l.b16 %v507
  %v604 = vunpack.c.l.b16 %v508
  %v605 = vunpack.c.l.b16 %v509
  %v606 = vunpack.c.l.b16 %v510
  %v607 = vunpack.c.l.b16 %v511
  %v608 = vunpack.c.l.b16 %v512
  %v609 = vunpack.c.l.b16 %v513
  %v610 = vunpack.c.l.b16 %v514
  %v611 = vunpack.c.l.b16 %v515
  %v612 = vunpack.c.l.b16 %v516
  %v613 = vunpack.c.l.b16 %v517
  %v614 = vunpack.c.l.b16 %v518
  %v615 = vunpack.c.l.b16 %v519
  %v616 = vunpack.c.l.b16 %v520
  %v617 = vunpack.c.l.b16 %v521
  %v618 = vunpack.c.l.b16 %v522
  %v619 = vunpack.c.l.b16 %v523
  %v620 = vunpack.c.l.b16 %v524
  %v621 = vunpack.c.l.b16 %v525
  %v622 = vunpack.c.l.b16 %v526
  %v623 = vunpack.c.l.b16 %v527
  %v624 = vpack.c.b16 %v577, %v576
  %v625 = vpack.c.b16 %v579, %v578
  %v626 = vpack.c.b16 %v581, %v580
  %v627 = vpack.c.b16 %v583, %v582
  %v628 = vpack.c.b16 %v585, %v584
  %v629 = vpack.c.b16 %v587, %v586
  %v630 = vpack.c.b16 %v589, %v588
  %v631 = vpack.c.b16 %v591, %v590
  %v632 = vpack.c.b16 %v593, %v592
  %v633 = vpack.c.b16 %v595, %v594
  %v634 = vpack.c.b16 %v597, %v596
  %v635 = vpack.c.b16 %v599, %v598
  %v636 = vpack.c.b16 %v601, %v600
  %v637 = vpack.c.b16 %v603, %v602
  %v638 = vpack.c.b16 %v605, %v604
  %v639 = vpack.c.b16 %v607, %v606
  %v640 = vpack.c.b16 %v609, %v608
  %v641 = vpack.c.b16 %v611, %v610
  %v642 = vpack.c.b16 %v613, %v612
  %v643 = vpack.c.b16 %v615, %v614
  %v644 = vpack.c.b16 %v617, %v616
  %v645 = vpack.c.b16 %v619, %v618
  %v646 = vpack.c.b16 %v621, %v620
  %v647 = vpack.c.b16 %v623, %v622
  %672 = vmatprep.subr.bf16.mxu0 0
  %673 = vmatpush1.bf16.msra.mxu0 %v624
  %674 = vmatprep.subr.bf16.mxu0 0
  %675 = vmatpush1.bf16.msra.mxu0 %v625
  %676 = vmatprep.subr.bf16.mxu0 0
  %677 = vmatpush1.bf16.msra.mxu0 %v626
  %678 = vmatprep.subr.bf16.mxu0 0
  %679 = vmatpush1.bf16.msra.mxu0 %v627
  %680 = vmatprep.subr.bf16.mxu0 0
  %681 = vmatpush1.bf16.msra.mxu0 %v628
  %682 = vmatprep.subr.bf16.mxu0 0
  %683 = vmatpush1.bf16.msra.mxu0 %v629
  %684 = vmatprep.subr.bf16.mxu0 0
  %685 = vmatpush1.bf16.msra.mxu0 %v630
  %686 = vmatprep.subr.bf16.mxu0 0
  %687 = vmatpush1.bf16.msra.mxu0 %v631
  %688 = vmatprep.subr.bf16.mxu0 0
  %689 = vmatpush1.bf16.msra.mxu0 %v632
  %690 = vmatprep.subr.bf16.mxu0 0
  %691 = vmatpush1.bf16.msra.mxu0 %v633
  %692 = vmatprep.subr.bf16.mxu0 0
  %693 = vmatpush1.bf16.msra.mxu0 %v634
  %694 = vmatprep.subr.bf16.mxu0 0
  %695 = vmatpush1.bf16.msra.mxu0 %v635
  %696 = vmatprep.subr.bf16.mxu0 0
  %697 = vmatpush1.bf16.msra.mxu0 %v636
  %698 = vmatprep.subr.bf16.mxu0 0
  %699 = vmatpush1.bf16.msra.mxu0 %v637
  %700 = vmatprep.subr.bf16.mxu0 0
  %701 = vmatpush1.bf16.msra.mxu0 %v638
  %702 = vmatprep.subr.bf16.mxu0 0
  %703 = vmatpush1.bf16.msra.mxu0 %v639
  %704 = vmatprep.mubr.bf16.mxu0 %v433
  %705 = vmatmul.mubr.bf16.gmra.mrb[0].mxu0 %v432
  %v706 = vpop.f32.mrb[0].mxu0
  %v707 = vadd.f32 0.0, %v706
  %v708 = vpop.f32.mrb[0].mxu0
  %v709 = vpop.f32.mrb[0].mxu0
  %v710 = vadd.f32 0.0, %v709
  %v711 = vpop.f32.mrb[0].mxu0
  %712 = vmatprep.mubr.bf16.mxu0 %v436
  %713 = vmatmul.mubr.bf16.gmra.mrb[0].mxu0 %v435
  %v714 = vpop.f32.mrb[0].mxu0
  %v715 = vadd.f32 0.0, %v714
  %v716 = vpop.f32.mrb[0].mxu0
  %v717 = vpop.f32.mrb[0].mxu0
  %v718 = vadd.f32 0.0, %v717
  %v719 = vpop.f32.mrb[0].mxu0
  %720 = vmatprep.mubr.bf16.mxu0 %v439
  %721 = vmatmul.mubr.bf16.gmra.mrb[0].mxu0 %v438
  %v722 = vpop.f32.mrb[0].mxu0
  %v723 = vadd.f32 0.0, %v722
  %v724 = vpop.f32.mrb[0].mxu0
  %v725 = vpop.f32.mrb[0].mxu0
  %v726 = vadd.f32 0.0, %v725
  %v727 = vpop.f32.mrb[0].mxu0
  %728 = vmatprep.mubr.bf16.mxu0 %v442
  %729 = vmatmul.mubr.bf16.gmra.mrb[0].mxu0 %v441
  %v730 = vpop.f32.mrb[0].mxu0
  %v731 = vadd.f32 0.0, %v730
  %v732 = vpop.f32.mrb[0].mxu0
  %v733 = vpop.f32.mrb[0].mxu0
  %v734 = vadd.f32 0.0, %v733
  %v735 = vpop.f32.mrb[0].mxu0
  %736 = vmatprep.mubr.bf16.mxu0 %v445
  %737 = vmatmul.mubr.bf16.gmra.mrb[0].mxu0 %v444
  %v738 = vpop.f32.mrb[0].mxu0
  %v739 = vadd.f32 0.0, %v738
  %v740 = vpop.f32.mrb[0].mxu0
  %v741 = vpop.f32.mrb[0].mxu0
  %v742 = vadd.f32 0.0, %v741
  %v743 = vpop.f32.mrb[0].mxu0
  %744 = vmatprep.mubr.bf16.mxu0 %v448
  %745 = vmatmul.mubr.bf16.gmra.mrb[0].mxu0 %v447
  %v746 = vpop.f32.mrb[0].mxu0
  %v747 = vadd.f32 0.0, %v746
  %v748 = vpop.f32.mrb[0].mxu0
  %v749 = vpop.f32.mrb[0].mxu0
  %v750 = vadd.f32 0.0, %v749
  %v751 = vpop.f32.mrb[0].mxu0
  %752 = vmatprep.mubr.bf16.mxu0 %v451
  %753 = vmatmul.mubr.bf16.gmra.mrb[0].mxu0 %v450
  %v754 = vpop.f32.mrb[0].mxu0
  %v755 = vadd.f32 0.0, %v754
  %v756 = vpop.f32.mrb[0].mxu0
  %v757 = vpop.f32.mrb[0].mxu0
  %v758 = vadd.f32 0.0, %v757
  %v759 = vpop.f32.mrb[0].mxu0
  %760 = vmatprep.mubr.bf16.mxu0 %v454
  %761 = vmatmul.mubr.bf16.gmra.mrb[0].mxu0 %v453
  %v762 = vpop.f32.mrb[0].mxu0
  %v763 = vadd.f32 0.0, %v762
  %v764 = vpop.f32.mrb[0].mxu0
  %v765 = vpop.f32.mrb[0].mxu0
  %v766 = vadd.f32 0.0, %v765
  %v767 = vpop.f32.mrb[0].mxu0
  %768 = vmatprep.mubr.bf16.mxu0 %v457
  %769 = vmatmul.mubr.bf16.gmra.mrb[0].mxu0 %v456
  %v770 = vpop.f32.mrb[0].mxu0
  %v771 = vadd.f32 0.0, %v770
  %v772 = vpop.f32.mrb[0].mxu0
  %v773 = vpop.f32.mrb[0].mxu0
  %v774 = vadd.f32 0.0, %v773
  %v775 = vpop.f32.mrb[0].mxu0
  %776 = vmatprep.mubr.bf16.mxu0 %v460
  %777 = vmatmul.mubr.bf16.gmra.mrb[0].mxu0 %v459
  %v778 = vpop.f32.mrb[0].mxu0
  %v779 = vadd.f32 0.0, %v778
  %v780 = vpop.f32.mrb[0].mxu0
  %v781 = vpop.f32.mrb[0].mxu0
  %v782 = vadd.f32 0.0, %v781
  %v783 = vpop.f32.mrb[0].mxu0
  %784 = vmatprep.mubr.bf16.mxu0 %v463
  %785 = vmatmul.mubr.bf16.gmra.mrb[0].mxu0 %v462
  %v786 = vpop.f32.mrb[0].mxu0
  %v787 = vadd.f32 0.0, %v786
  %v788 = vpop.f32.mrb[0].mxu0
  %v789 = vpop.f32.mrb[0].mxu0
  %v790 = vadd.f32 0.0, %v789
  %v791 = vpop.f32.mrb[0].mxu0
  %792 = vmatprep.mubr.bf16.mxu0 %v466
  %793 = vmatmul.mubr.bf16.gmra.mrb[0].mxu0 %v465
  %v794 = vpop.f32.mrb[0].mxu0
  %v795 = vadd.f32 0.0, %v794
  %v796 = vpop.f32.mrb[0].mxu0
  %v797 = vpop.f32.mrb[0].mxu0
  %v798 = vadd.f32 0.0, %v797
  %v799 = vpop.f32.mrb[0].mxu0
  %800 = vmatprep.mubr.bf16.mxu0 %v469
  %801 = vmatmul.mubr.bf16.gmra.mrb[0].mxu0 %v468
  %v802 = vpop.f32.mrb[0].mxu0
  %v803 = vadd.f32 0.0, %v802
  %v804 = vpop.f32.mrb[0].mxu0
  %v805 = vpop.f32.mrb[0].mxu0
  %v806 = vadd.f32 0.0, %v805
  %v807 = vpop.f32.mrb[0].mxu0
  %808 = vmatprep.mubr.bf16.mxu0 %v472
  %809 = vmatmul.mubr.bf16.gmra.mrb[0].mxu0 %v471
  %v810 = vpop.f32.mrb[0].mxu0
  %v811 = vadd.f32 0.0, %v810
  %v812 = vpop.f32.mrb[0].mxu0
  %v813 = vpop.f32.mrb[0].mxu0
  %v814 = vadd.f32 0.0, %v813
  %v815 = vpop.f32.mrb[0].mxu0
  %816 = vmatprep.mubr.bf16.mxu0 %v475
  %817 = vmatmul.mubr.bf16.gmra.mrb[0].mxu0 %v474
  %v818 = vpop.f32.mrb[0].mxu0
  %v819 = vadd.f32 0.0, %v818
  %v820 = vpop.f32.mrb[0].mxu0
  %v821 = vpop.f32.mrb[0].mxu0
  %v822 = vadd.f32 0.0, %v821
  %v823 = vpop.f32.mrb[0].mxu0
  %824 = vmatprep.mubr.bf16.mxu0 %v478
  %825 = vmatmul.mubr.bf16.gmra.mrb[0].mxu0 %v477
  %v826 = vpop.f32.mrb[0].mxu0
  %v827 = vadd.f32 0.0, %v826
  %v828 = vpop.f32.mrb[0].mxu0
  %v829 = vpop.f32.mrb[0].mxu0
  %v830 = vadd.f32 0.0, %v829
  %v831 = vpop.f32.mrb[0].mxu0
  %832 = vdwg.mxu0
  %833 = vmatprep.subr.bf16.mxu0 0
  %834 = vmatpush1.bf16.msra.mxu0 %v640
  %835 = vmatprep.subr.bf16.mxu0 0
  %836 = vmatpush1.bf16.msra.mxu0 %v641
  %837 = vmatprep.subr.bf16.mxu0 0
  %838 = vmatpush1.bf16.msra.mxu0 %v642
  %839 = vmatprep.subr.bf16.mxu0 0
  %840 = vmatpush1.bf16.msra.mxu0 %v643
  %841 = vmatprep.subr.bf16.mxu0 0
  %842 = vmatpush1.bf16.msra.mxu0 %v644
  %843 = vmatprep.subr.bf16.mxu0 0
  %844 = vmatpush1.bf16.msra.mxu0 %v645
  %845 = vmatprep.subr.bf16.mxu0 0
  %846 = vmatpush1.bf16.msra.mxu0 %v646
  %847 = vmatprep.subr.bf16.mxu0 0
  %848 = vmatpush1.bf16.msra.mxu0 %v647
  %849 = vmatprep.subr.bf16.mxu0 0
  %850 = vmatpush1.bf16.msra.mxu0 0
  %851 = vmatprep.subr.bf16.mxu0 0
  %852 = vmatpush1.bf16.msra.mxu0 0
  %853 = vmatprep.subr.bf16.mxu0 0
  %854 = vmatpush1.bf16.msra.mxu0 0
  %855 = vmatprep.subr.bf16.mxu0 0
  %856 = vmatpush1.bf16.msra.mxu0 0
  %857 = vmatprep.subr.bf16.mxu0 0
  %858 = vmatpush1.bf16.msra.mxu0 0
  %859 = vmatprep.subr.bf16.mxu0 0
  %860 = vmatpush1.bf16.msra.mxu0 0
  %861 = vmatprep.subr.bf16.mxu0 0
  %862 = vmatpush1.bf16.msra.mxu0 0
  %863 = vmatprep.subr.bf16.mxu0 0
  %864 = vmatpush1.bf16.msra.mxu0 0
  %865 = vmatprep.mubr.bf16.mxu0 0
  %866 = vmatmul.mubr.bf16.gmra.mrb[0].mxu0 %v434
  %v867 = vpop.f32.mrb[0].mxu0
  %v868 = vadd.f32 %v707, %v867
  %v869 = vpop.f32.mrb[0].mxu0
  %v870 = vpop.f32.mrb[0].mxu0
  %v871 = vadd.f32 %v710, %v870
  %v872 = vpop.f32.mrb[0].mxu0
  %873 = vmatprep.mubr.bf16.mxu0 0
  %874 = vmatmul.mubr.bf16.gmra.mrb[0].mxu0 %v437
  %v875 = vpop.f32.mrb[0].mxu0
  %v876 = vadd.f32 %v715, %v875
  %v877 = vpop.f32.mrb[0].mxu0
  %v878 = vpop.f32.mrb[0].mxu0
  %v879 = vadd.f32 %v718, %v878
  %v880 = vpop.f32.mrb[0].mxu0
  %881 = vmatprep.mubr.bf16.mxu0 0
  %882 = vmatmul.mubr.bf16.gmra.mrb[0].mxu0 %v440
  %v883 = vpop.f32.mrb[0].mxu0
  %v884 = vadd.f32 %v723, %v883
  %v885 = vpop.f32.mrb[0].mxu0
  %v886 = vpop.f32.mrb[0].mxu0
  %v887 = vadd.f32 %v726, %v886
  %v888 = vpop.f32.mrb[0].mxu0
  %889 = vmatprep.mubr.bf16.mxu0 0
  %890 = vmatmul.mubr.bf16.gmra.mrb[0].mxu0 %v443
  %v891 = vpop.f32.mrb[0].mxu0
  %v892 = vadd.f32 %v731, %v891
  %v893 = vpop.f32.mrb[0].mxu0
  %v894 = vpop.f32.mrb[0].mxu0
  %v895 = vadd.f32 %v734, %v894
  %v896 = vpop.f32.mrb[0].mxu0
  %897 = vmatprep.mubr.bf16.mxu0 0
  %898 = vmatmul.mubr.bf16.gmra.mrb[0].mxu0 %v446
  %v899 = vpop.f32.mrb[0].mxu0
  %v900 = vadd.f32 %v739, %v899
  %v901 = vpop.f32.mrb[0].mxu0
  %v902 = vpop.f32.mrb[0].mxu0
  %v903 = vadd.f32 %v742, %v902
  %v904 = vpop.f32.mrb[0].mxu0
  %905 = vmatprep.mubr.bf16.mxu0 0
  %906 = vmatmul.mubr.bf16.gmra.mrb[0].mxu0 %v449
  %v907 = vpop.f32.mrb[0].mxu0
  %v908 = vadd.f32 %v747, %v907
  %v909 = vpop.f32.mrb[0].mxu0
  %v910 = vpop.f32.mrb[0].mxu0
  %v911 = vadd.f32 %v750, %v910
  %v912 = vpop.f32.mrb[0].mxu0
  %913 = vmatprep.mubr.bf16.mxu0 0
  %914 = vmatmul.mubr.bf16.gmra.mrb[0].mxu0 %v452
  %v915 = vpop.f32.mrb[0].mxu0
  %v916 = vadd.f32 %v755, %v915
  %v917 = vpop.f32.mrb[0].mxu0
  %v918 = vpop.f32.mrb[0].mxu0
  %v919 = vadd.f32 %v758, %v918
  %v920 = vpop.f32.mrb[0].mxu0
  %921 = vmatprep.mubr.bf16.mxu0 0
  %922 = vmatmul.mubr.bf16.gmra.mrb[0].mxu0 %v455
  %v923 = vpop.f32.mrb[0].mxu0
  %v924 = vadd.f32 %v763, %v923
  %v925 = vpop.f32.mrb[0].mxu0
  %v926 = vpop.f32.mrb[0].mxu0
  %v927 = vadd.f32 %v766, %v926
  %v928 = vpop.f32.mrb[0].mxu0
  %929 = vmatprep.mubr.bf16.mxu0 0
  %930 = vmatmul.mubr.bf16.gmra.mrb[0].mxu0 %v458
  %v931 = vpop.f32.mrb[0].mxu0
  %v932 = vadd.f32 %v771, %v931
  %v933 = vpop.f32.mrb[0].mxu0
  %v934 = vpop.f32.mrb[0].mxu0
  %v935 = vadd.f32 %v774, %v934
  %v936 = vpop.f32.mrb[0].mxu0
  %937 = vmatprep.mubr.bf16.mxu0 0
  %938 = vmatmul.mubr.bf16.gmra.mrb[0].mxu0 %v461
  %v939 = vpop.f32.mrb[0].mxu0
  %v940 = vadd.f32 %v779, %v939
  %v941 = vpop.f32.mrb[0].mxu0
  %v942 = vpop.f32.mrb[0].mxu0
  %v943 = vadd.f32 %v782, %v942
  %v944 = vpop.f32.mrb[0].mxu0
  %945 = vmatprep.mubr.bf16.mxu0 0
  %946 = vmatmul.mubr.bf16.gmra.mrb[0].mxu0 %v464
  %v947 = vpop.f32.mrb[0].mxu0
  %v948 = vadd.f32 %v787, %v947
  %v949 = vpop.f32.mrb[0].mxu0
  %v950 = vpop.f32.mrb[0].mxu0
  %v951 = vadd.f32 %v790, %v950
  %v952 = vpop.f32.mrb[0].mxu0
  %953 = vmatprep.mubr.bf16.mxu0 0
  %954 = vmatmul.mubr.bf16.gmra.mrb[0].mxu0 %v467
  %v955 = vpop.f32.mrb[0].mxu0
  %v956 = vadd.f32 %v795, %v955
  %v957 = vpop.f32.mrb[0].mxu0
  %v958 = vpop.f32.mrb[0].mxu0
  %v959 = vadd.f32 %v798, %v958
  %v960 = vpop.f32.mrb[0].mxu0
  %961 = vmatprep.mubr.bf16.mxu0 0
  %962 = vmatmul.mubr.bf16.gmra.mrb[0].mxu0 %v470
  %v963 = vpop.f32.mrb[0].mxu0
  %v964 = vadd.f32 %v803, %v963
  %v965 = vpop.f32.mrb[0].mxu0
  %v966 = vpop.f32.mrb[0].mxu0
  %v967 = vadd.f32 %v806, %v966
  %v968 = vpop.f32.mrb[0].mxu0
  %969 = vmatprep.mubr.bf16.mxu0 0
  %970 = vmatmul.mubr.bf16.gmra.mrb[0].mxu0 %v473
  %v971 = vpop.f32.mrb[0].mxu0
  %v972 = vadd.f32 %v811, %v971
  %v973 = vpop.f32.mrb[0].mxu0
  %v974 = vpop.f32.mrb[0].mxu0
  %v975 = vadd.f32 %v814, %v974
  %v976 = vpop.f32.mrb[0].mxu0
  %977 = vmatprep.mubr.bf16.mxu0 0
  %978 = vmatmul.mubr.bf16.gmra.mrb[0].mxu0 %v476
  %v979 = vpop.f32.mrb[0].mxu0
  %v980 = vadd.f32 %v819, %v979
  %v981 = vpop.f32.mrb[0].mxu0
  %v982 = vpop.f32.mrb[0].mxu0
  %v983 = vadd.f32 %v822, %v982
  %v984 = vpop.f32.mrb[0].mxu0
  %985 = vmatprep.mubr.bf16.mxu0 0
  %986 = vmatmul.mubr.bf16.gmra.mrb[0].mxu0 %v479
  %v987 = vpop.f32.mrb[0].mxu0
  %v988 = vadd.f32 %v827, %v987
  %v989 = vpop.f32.mrb[0].mxu0
  %v990 = vpop.f32.mrb[0].mxu0
  %v991 = vadd.f32 %v830, %v990
  %v992 = vpop.f32.mrb[0].mxu0
  %993 = vdwg.mxu0
  %994 = vst [vmem:[%s2] sm:$0xff] %v868
  %995 = vst [vmem:[%s2 + $0x8] sm:$0xff] %v871
  %996 = vst [vmem:[%s2 + $0x10] sm:$0xff] %v876
  %997 = vst [vmem:[%s2 + $0x18] sm:$0xff] %v879
  %998 = vst [vmem:[%s2 + $0x20] sm:$0xff] %v884
  %999 = vst [vmem:[%s2 + $0x28] sm:$0xff] %v887
  %1000 = vst [vmem:[%s2 + $0x30] sm:$0xff] %v892
  %1001 = vst [vmem:[%s2 + $0x38] sm:$0xff] %v895
  %1002 = vst [vmem:[%s2 + $0x40] sm:$0xff] %v900
  %1003 = vst [vmem:[%s2 + $0x48] sm:$0xff] %v903
  %1004 = vst [vmem:[%s2 + $0x50] sm:$0xff] %v908
  %1005 = vst [vmem:[%s2 + $0x58] sm:$0xff] %v911
  %1006 = vst [vmem:[%s2 + $0x60] sm:$0xff] %v916
  %1007 = vst [vmem:[%s2 + $0x68] sm:$0xff] %v919
  %1008 = vst [vmem:[%s2 + $0x70] sm:$0xff] %v924
  %1009 = vst [vmem:[%s2 + $0x78] sm:$0xff] %v927
  %1010 = vst [vmem:[%s2 + $0x80] sm:$0xff] %v932
  %1011 = vst [vmem:[%s2 + $0x88] sm:$0xff] %v935
  %1012 = vst [vmem:[%s2 + $0x90] sm:$0xff] %v940
  %1013 = vst [vmem:[%s2 + $0x98] sm:$0xff] %v943
  %1014 = vst [vmem:[%s2 + $0xa0] sm:$0xff] %v948
  %1015 = vst [vmem:[%s2 + $0xa8] sm:$0xff] %v951
  %1016 = vst [vmem:[%s2 + $0xb0] sm:$0xff] %v956
  %1017 = vst [vmem:[%s2 + $0xb8] sm:$0xff] %v959
  %1018 = vst [vmem:[%s2 + $0xc0] sm:$0xff] %v964
  %1019 = vst [vmem:[%s2 + $0xc8] sm:$0xff] %v967
  %1020 = vst [vmem:[%s2 + $0xd0] sm:$0xff] %v972
  %1021 = vst [vmem:[%s2 + $0xd8] sm:$0xff] %v975
  %1022 = vst [vmem:[%s2 + $0xe0] sm:$0xff] %v980
  %1023 = vst [vmem:[%s2 + $0xe8] sm:$0xff] %v983
  %1024 = vst [vmem:[%s2 + $0xf0] sm:$0xff] %v988
  %1025 = vst [vmem:[%s2 + $0xf8] sm:$0xff] %v991
  // Predicated region
  $region10: #{_path_embed_forward.1} parent=0 // pred_check
    _
  $region11: #{_path_embed_forward.1} parent=0 // pred_check_branch
    %1027 = sbr.rel (0) target = $region13
  $region12: #{_path_embed_forward.1} parent=0 // pred_region
    _
  $region13: #{_path_embed_forward.1} parent=0 // pred_fallthru
    _
  // Predicated region
  $region14: #{_path_embed_forward.1} parent=0 // pred_check
    _
  $region15: #{_path_embed_forward.1} parent=0 // pred_check_branch
    %1029 = sbr.rel (0) target = $region17
  $region16: #{_path_embed_forward.1} parent=0 // pred_region
    _
  $region17: #{_path_embed_forward.1} parent=0 // pred_fallthru
    _

</llo_original>
